<compile_context>
chip_gen: v7x
topology: tpu7x:2x2x1
jax: 0.10.0
libtpu: 0.0.40
codegen_flags: <defaults>
</compile_context>

<pallas_src>
import jax
import jax.numpy as jnp
from jax.experimental import pallas as pl
from jax.experimental.pallas import tpu as pltpu


# ----------------------------- activations ---------------------------------

def _apply_activation(name, h):
    # Used both inside the kernel and by the pure-JAX reference.
    if name == "relu":
        return jnp.maximum(h, 0.0)
    if name == "softplus":
        # Numerically stable softplus: max(h,0) + log1p(exp(-|h|)).
        return jnp.maximum(h, 0.0) + jnp.log1p(jnp.exp(-jnp.abs(h)))
    if name == "tanh":
        return jnp.tanh(h)
    if name == "sigmoid":
        return jax.nn.sigmoid(h)
    raise ValueError(f"unsupported activation: {name}")


# ------------------------------- kernel -------------------------------------

def _make_mlp_kernel_t(act_names, compute_dtype):
    """Transposed (lane-dense) fused MLP kernel.

    refs = (xT_ref, wT0, bT0, wT1, bT1, ..., oT_ref)
      xT_ref : (d_in, tm)      batch on lanes
      wT_i   : (d_out_i, d_in_i) resident in VMEM (single-buffered)
      bT_i   : (d_out_i, 1)
      oT_ref : (d_out, tm)
    """
    n_layers = len(act_names)

    def kernel(*refs):
        x_ref = refs[0]
        o_ref = refs[-1]
        wb = refs[1:-1]

        h = x_ref[...].astype(jnp.float32)            # (d_in, tm)
        for layer in range(n_layers):
            w_t = wb[2 * layer][...]                  # (d_out_i, d_in_i)
            b_t = wb[2 * layer + 1][...]              # (d_out_i, 1)
            rhs = h if compute_dtype == jnp.float32 else h.astype(compute_dtype)
            # MXU matmul, f32 accumulation.
            h = jnp.dot(w_t, rhs, preferred_element_type=jnp.float32)
            # Bias add + activation in f32 on full-lane vregs (batch on lanes).
            h = h + b_t.astype(jnp.float32)
            h = _apply_activation(act_names[layer], h)
        o_ref[...] = h.astype(o_ref.dtype)

    return kernel


# --------------------------- tiling / VMEM helpers ---------------------------

def _vmem_capacity_bytes():
    try:
        info = pltpu.get_tpu_info()
        cap = getattr(info, "vmem_capacity_bytes", None)
        if cap:
            return int(cap)
    except Exception:
        pass
    return 64 * 1024 * 1024  # conservative (v7x per-TensorCore VMEM)


def _choose_batch_tile(B, d_in, feat_dims, out_itemsize, weight_bytes, vmem_cap):
    """Pick the batch (lane) tile width.

    Lane axis blocks must be a multiple of 128 or the full array extent.
    """
    d_out = feat_dims[-1]
    max_feat = max([d_in] + list(feat_dims))
    # f32 bytes per batch column: double-buffered x/out tiles + ~2 live intermediates.
    per_col = 4 * (2 * d_in + 2 * max_feat) + 2 * out_itemsize * d_out
    budget = min(vmem_cap // 2, 64 * 1024 * 1024) - 2 * weight_bytes
    budget = max(budget, 1 << 20)
    tm_cap = max(128, budget // max(per_col, 1))

    if B <= 128:
        return B  # single full-extent block (grid = 1); trivial amount of work
    # At least 2 grid steps so v7x's two TensorCores both stream batch tiles.
    half = max(128, ((B + 1) // 2 // 128) * 128)
    tm = min(8192, tm_cap, half)
    return max(128, (tm // 128) * 128)


# ------------------------------- wrapper -------------------------------------

def simple_perceptron_forward(x, weights, biases, act_names, *, use_bf16_weights=None):
    """Fused MLP forward pass.

    x:        (B, num_input_layers)
    weights:  list of (d_in, d_out) float32
    biases:   list of (1, d_out) float32
    act_names:list of activation names, one per linear layer
    returns:  (B, num_output_layers), dtype follows x.dtype
    """
    assert x.ndim == 2
    assert len(weights) == len(biases) == len(act_names)
    B, d_in = x.shape
    feat_dims = [w.shape[1] for w in weights]
    d_out = feat_dims[-1]
    out_dtype = x.dtype
    out_itemsize = jnp.dtype(out_dtype).itemsize
    max_feat = max([d_in] + feat_dims)

    # bf16 weights only pay off when the MLP is actually MXU-bound.
    if use_bf16_weights is None:
        use_bf16_weights = max_feat >= 256
    compute_dtype = jnp.bfloat16 if use_bf16_weights else jnp.float32

    # Lane-dense (transposed) operands: batch on lanes, features on sublanes.
    x_t = x.T                                               # (d_in, B)
    w_ts = [w.T.astype(compute_dtype) for w in weights]     # (d_out_i, d_in_i)
    b_ts = [b.reshape(-1, 1).astype(jnp.float32) for b in biases]  # (d_out_i, 1)

    weight_bytes = sum(int(w.size) * jnp.dtype(w.dtype).itemsize for w in w_ts)
    weight_bytes += sum(int(b.size) * 4 for b in b_ts)

    vmem_cap = _vmem_capacity_bytes()
    tm = _choose_batch_tile(B, d_in, feat_dims, out_itemsize, weight_bytes, vmem_cap)
    grid = (pl.cdiv(B, tm),)

    # Explicit scoped-VMEM limit so large tiles aren't rejected by the default.
    est = (2 * weight_bytes
           + 2 * tm * (d_in * 4 + d_out * out_itemsize)
           + 4 * tm * max_feat * 4)
    vmem_limit = int(min(vmem_cap * 3 // 4, max(32 * 1024 * 1024, est)))

    kernel = _make_mlp_kernel_t(tuple(act_names), compute_dtype)
    args = [x_t]
    for w_t, b_t in zip(w_ts, b_ts):
        args.extend([w_t, b_t])

    def _build_in_specs(single_buffer_weights):
        specs = [pl.BlockSpec((d_in, tm), lambda i: (0, i))]
        for w_t, b_t in zip(w_ts, b_ts):
            kw = {}
            if single_buffer_weights:
                # Constant index_map -> a second pipeline buffer is pure waste.
                kw["pipeline_mode"] = pl.Buffered(1)
            specs.append(pl.BlockSpec(w_t.shape, lambda i: (0, 0), **kw))
            specs.append(pl.BlockSpec(b_t.shape, lambda i: (0, 0), **kw))
        return specs

    def _run(single_buffer_weights):
        return pl.pallas_call(
            kernel,
            out_shape=jax.ShapeDtypeStruct((d_out, B), out_dtype),
            grid_spec=pltpu.PrefetchScalarGridSpec(
                num_scalar_prefetch=0,
                grid=grid,
                in_specs=_build_in_specs(single_buffer_weights),
                out_specs=pl.BlockSpec((d_out, tm), lambda i: (0, i)),
            ),
            compiler_params=pltpu.CompilerParams(
                # Batch tiles are independent -> shard across v7x's 2 TensorCores.
                dimension_semantics=("parallel",),
                vmem_limit_bytes=vmem_limit,
            ),
        )(*args)

    try:
        out_t = _run(True)
    except Exception:
        # Fallback: default double-buffering if Buffered(1) is rejected.
        out_t = _run(False)

    return out_t.T  # (B, d_out)


# ----------------------- parameter construction ------------------------------

def build_simple_perceptron_params(key, act_functions, num_input_layers,
                                   hidden_layers, num_output_layers):
    """Mirrors SimplePerceptron.__init__ layer construction, including its
    act_functions[i] indexing for intermediate hidden layers (deliberately
    replicating the torch module's indexing)."""
    dims = [num_input_layers] + list(hidden_layers) + [num_output_layers]

    layer_acts = [act_functions[0]]
    for i in range(0, len(hidden_layers) - 1):
        layer_acts.append(act_functions[i])
    layer_acts.append(act_functions[-1])

    weights, biases = [], []
    for d_i, d_o in zip(dims[:-1], dims[1:]):
        key, kw, kb = jax.random.split(key, 3)
        bound = 1.0 / float(d_i) ** 0.5  # torch.nn.Linear default init range
        w = jax.random.uniform(kw, (d_i, d_o), jnp.float32, -bound, bound)
        b = jax.random.uniform(kb, (1, d_o), jnp.float32, -bound, bound)
        weights.append(w)
        biases.append(b)
    return weights, biases, layer_acts


def _reference(x, weights, biases, act_names):
    h = x
    for w, b, a in zip(weights, biases, act_names):
        h = h @ w + b
        h = _apply_activation(a, h)
    return h


# --------------------------------- test --------------------------------------

if __name__ == "__main__":
    key = jax.random.PRNGKey(0)

    # Small shapes consistent with the module's forward: x is (batch, num_input).
    batch, num_in, hidden, num_out = 8, 4, [32, 32], 2
    act_functions = ["relu", "relu", "softplus"]

    key, kx = jax.random.split(key)
    x = jax.random.normal(kx, (batch, num_in), dtype=jnp.float32)

    weights, biases, layer_acts = build_simple_perceptron_params(
        key, act_functions, num_in, hidden, num_out)

    y = simple_perceptron_forward(x, weights, biases, layer_acts)
    y = jax.block_until_ready(y)

    y_ref = _reference(x, weights, biases, layer_acts)
    assert y.shape == (batch, num_out)
    assert jnp.allclose(y, y_ref, rtol=1e-5, atol=1e-5), "mismatch vs reference"

    print("KERNEL_OK")
</pallas_src>

<mosaic_0001>
module attributes {stable_mosaic.version = 11 : i64} {
  func.func @kernel(%arg0: i32, %arg1: memref<4x8xf32, #tpu.memory_space<vmem>>, %arg2: memref<32x4xf32, #tpu.memory_space<vmem>>, %arg3: memref<32x1xf32, #tpu.memory_space<vmem>>, %arg4: memref<32x32xf32, #tpu.memory_space<vmem>>, %arg5: memref<32x1xf32, #tpu.memory_space<vmem>>, %arg6: memref<2x32xf32, #tpu.memory_space<vmem>>, %arg7: memref<2x1xf32, #tpu.memory_space<vmem>>, %arg8: memref<2x8xf32, #tpu.memory_space<vmem>>) attributes {dimension_semantics = [#tpu.dimension_semantics<parallel>], iteration_bounds = array<i64: 1>, scalar_prefetch = 0 : i64, scratch_operands = 0 : i64, tpu.core_type = #tpu.core_type<tc>, window_params = [{transform_indices = @transform_0, window_bounds = array<i64: 4, 8>}, {pipeline_mode = #tpu.pipeline_mode<synchronous>, transform_indices = @transform_1, window_bounds = array<i64: 32, 4>}, {pipeline_mode = #tpu.pipeline_mode<synchronous>, transform_indices = @transform_2, window_bounds = array<i64: 32, 1>}, {pipeline_mode = #tpu.pipeline_mode<synchronous>, transform_indices = @transform_3, window_bounds = array<i64: 32, 32>}, {pipeline_mode = #tpu.pipeline_mode<synchronous>, transform_indices = @transform_4, window_bounds = array<i64: 32, 1>}, {pipeline_mode = #tpu.pipeline_mode<synchronous>, transform_indices = @transform_5, window_bounds = array<i64: 2, 32>}, {pipeline_mode = #tpu.pipeline_mode<synchronous>, transform_indices = @transform_6, window_bounds = array<i64: 2, 1>}, {transform_indices = @transform_7, window_bounds = array<i64: 2, 8>}]} {
    %c0 = arith.constant 0 : index
    %c0_0 = arith.constant 0 : index
    %0 = vector.load %arg1[%c0, %c0_0] : memref<4x8xf32, #tpu.memory_space<vmem>>, vector<4x8xf32>
    %c0_1 = arith.constant 0 : index
    %c0_2 = arith.constant 0 : index
    %1 = vector.load %arg2[%c0_1, %c0_2] : memref<32x4xf32, #tpu.memory_space<vmem>>, vector<32x4xf32>
    %c0_3 = arith.constant 0 : index
    %c0_4 = arith.constant 0 : index
    %2 = vector.load %arg3[%c0_3, %c0_4] : memref<32x1xf32, #tpu.memory_space<vmem>>, vector<32x1xf32>
    %cst = arith.constant dense<0.000000e+00> : vector<32x8xf32>
    %3 = tpu.matmul %1, %0, %cst {dimension_numbers = #tpu.dot_dimension_numbers<[1], [0], [0], [1], [0, 0, 1, 1], [], []>} : vector<32x4xf32>, vector<4x8xf32>, vector<32x8xf32> -> vector<32x8xf32>
    %4 = vector.broadcast %2 : vector<32x1xf32> to vector<32x8xf32>
    %5 = arith.addf %3, %4 : vector<32x8xf32>
    %cst_5 = arith.constant 0.000000e+00 : f32
    %6 = vector.broadcast %cst_5 : f32 to vector<32x8xf32>
    %7 = arith.maximumf %5, %6 : vector<32x8xf32>
    %c0_6 = arith.constant 0 : index
    %c0_7 = arith.constant 0 : index
    %8 = vector.load %arg4[%c0_6, %c0_7] : memref<32x32xf32, #tpu.memory_space<vmem>>, vector<32x32xf32>
    %c0_8 = arith.constant 0 : index
    %c0_9 = arith.constant 0 : index
    %9 = vector.load %arg5[%c0_8, %c0_9] : memref<32x1xf32, #tpu.memory_space<vmem>>, vector<32x1xf32>
    %cst_10 = arith.constant dense<0.000000e+00> : vector<32x8xf32>
    %10 = tpu.matmul %8, %7, %cst_10 {dimension_numbers = #tpu.dot_dimension_numbers<[1], [0], [0], [1], [0, 0, 1, 1], [], []>} : vector<32x32xf32>, vector<32x8xf32>, vector<32x8xf32> -> vector<32x8xf32>
    %11 = vector.broadcast %9 : vector<32x1xf32> to vector<32x8xf32>
    %12 = arith.addf %10, %11 : vector<32x8xf32>
    %cst_11 = arith.constant 0.000000e+00 : f32
    %13 = vector.broadcast %cst_11 : f32 to vector<32x8xf32>
    %14 = arith.maximumf %12, %13 : vector<32x8xf32>
    %c0_12 = arith.constant 0 : index
    %c0_13 = arith.constant 0 : index
    %15 = vector.load %arg6[%c0_12, %c0_13] : memref<2x32xf32, #tpu.memory_space<vmem>>, vector<2x32xf32>
    %c0_14 = arith.constant 0 : index
    %c0_15 = arith.constant 0 : index
    %16 = vector.load %arg7[%c0_14, %c0_15] : memref<2x1xf32, #tpu.memory_space<vmem>>, vector<2x1xf32>
    %cst_16 = arith.constant dense<0.000000e+00> : vector<2x8xf32>
    %17 = tpu.matmul %15, %14, %cst_16 {dimension_numbers = #tpu.dot_dimension_numbers<[1], [0], [0], [1], [0, 0, 1, 1], [], []>} : vector<2x32xf32>, vector<32x8xf32>, vector<2x8xf32> -> vector<2x8xf32>
    %18 = vector.broadcast %16 : vector<2x1xf32> to vector<2x8xf32>
    %19 = arith.addf %17, %18 : vector<2x8xf32>
    %cst_17 = arith.constant 0.000000e+00 : f32
    %20 = vector.broadcast %cst_17 : f32 to vector<2x8xf32>
    %21 = arith.maximumf %19, %20 : vector<2x8xf32>
    %22 = math.absf %19 : vector<2x8xf32>
    %cst_18 = arith.constant 0.000000e+00 : f32
    %23 = vector.broadcast %cst_18 : f32 to vector<2x8xf32>
    %24 = arith.subf %23, %22 : vector<2x8xf32>
    %25 = math.exp %24 : vector<2x8xf32>
    %26 = math.log1p %25 : vector<2x8xf32>
    %27 = arith.addf %21, %26 : vector<2x8xf32>
    %c0_19 = arith.constant 0 : index
    %c0_20 = arith.constant 0 : index
    %28 = vector.load %arg8[%c0_19, %c0_20] : memref<2x8xf32, #tpu.memory_space<vmem>>, vector<2x8xf32>
    tpu.vector_store %arg8[%c0_19, %c0_20], %27 {strides = array<i32>} : memref<2x8xf32, #tpu.memory_space<vmem>>, vector<2x8xf32>,
    return
  }
  func.func @transform_0(%arg0: i32) -> (i32, i32) {
    %c0_i32 = arith.constant 0 : i32
    %c0_i32_0 = arith.constant 0 : i32
    return %c0_i32, %arg0 : i32, i32
  }
  func.func @transform_1(%arg0: i32) -> (i32, i32) {
    %c0_i32 = arith.constant 0 : i32
    %c0_i32_0 = arith.constant 0 : i32
    %c0_i32_1 = arith.constant 0 : i32
    return %c0_i32, %c0_i32_0 : i32, i32
  }
  func.func @transform_2(%arg0: i32) -> (i32, i32) {
    %c0_i32 = arith.constant 0 : i32
    %c0_i32_0 = arith.constant 0 : i32
    %c0_i32_1 = arith.constant 0 : i32
    return %c0_i32, %c0_i32_0 : i32, i32
  }
  func.func @transform_3(%arg0: i32) -> (i32, i32) {
    %c0_i32 = arith.constant 0 : i32
    %c0_i32_0 = arith.constant 0 : i32
    %c0_i32_1 = arith.constant 0 : i32
    return %c0_i32, %c0_i32_0 : i32, i32
  }
  func.func @transform_4(%arg0: i32) -> (i32, i32) {
    %c0_i32 = arith.constant 0 : i32
    %c0_i32_0 = arith.constant 0 : i32
    %c0_i32_1 = arith.constant 0 : i32
    return %c0_i32, %c0_i32_0 : i32, i32
  }
  func.func @transform_5(%arg0: i32) -> (i32, i32) {
    %c0_i32 = arith.constant 0 : i32
    %c0_i32_0 = arith.constant 0 : i32
    %c0_i32_1 = arith.constant 0 : i32
    return %c0_i32, %c0_i32_0 : i32, i32
  }
  func.func @transform_6(%arg0: i32) -> (i32, i32) {
    %c0_i32 = arith.constant 0 : i32
    %c0_i32_0 = arith.constant 0 : i32
    %c0_i32_1 = arith.constant 0 : i32
    return %c0_i32, %c0_i32_0 : i32, i32
  }
  func.func @transform_7(%arg0: i32) -> (i32, i32) {
    %c0_i32 = arith.constant 0 : i32
    %c0_i32_0 = arith.constant 0 : i32
    return %c0_i32, %arg0 : i32, i32
  }
}

module attributes {stable_mosaic.version = 11 : i64} {
  func.func @kernel(%arg0: i32, %arg1: memref<4x8xf32, #tpu.memory_space<vmem>>, %arg2: memref<32x4xf32, #tpu.memory_space<vmem>>, %arg3: memref<32x1xf32, #tpu.memory_space<vmem>>, %arg4: memref<32x32xf32, #tpu.memory_space<vmem>>, %arg5: memref<32x1xf32, #tpu.memory_space<vmem>>, %arg6: memref<2x32xf32, #tpu.memory_space<vmem>>, %arg7: memref<2x1xf32, #tpu.memory_space<vmem>>, %arg8: memref<2x8xf32, #tpu.memory_space<vmem>>) attributes {dimension_semantics = [#tpu.dimension_semantics<parallel>], iteration_bounds = array<i64: 1>, scalar_prefetch = 0 : i64, scratch_operands = 0 : i64, tpu.core_type = #tpu.core_type<tc>, window_params = [{transform_indices = @transform_0, window_bounds = array<i64: 4, 8>}, {pipeline_mode = #tpu.pipeline_mode<synchronous>, transform_indices = @transform_1, window_bounds = array<i64: 32, 4>}, {pipeline_mode = #tpu.pipeline_mode<synchronous>, transform_indices = @transform_2, window_bounds = array<i64: 32, 1>}, {pipeline_mode = #tpu.pipeline_mode<synchronous>, transform_indices = @transform_3, window_bounds = array<i64: 32, 32>}, {pipeline_mode = #tpu.pipeline_mode<synchronous>, transform_indices = @transform_4, window_bounds = array<i64: 32, 1>}, {pipeline_mode = #tpu.pipeline_mode<synchronous>, transform_indices = @transform_5, window_bounds = array<i64: 2, 32>}, {pipeline_mode = #tpu.pipeline_mode<synchronous>, transform_indices = @transform_6, window_bounds = array<i64: 2, 1>}, {transform_indices = @transform_7, window_bounds = array<i64: 2, 8>}]} {
    %c0 = arith.constant 0 : index
    %c0_0 = arith.constant 0 : index
    %0 = vector.load %arg1[%c0, %c0_0] : memref<4x8xf32, #tpu.memory_space<vmem>>, vector<4x8xf32>
    %c0_1 = arith.constant 0 : index
    %c0_2 = arith.constant 0 : index
    %1 = vector.load %arg2[%c0_1, %c0_2] : memref<32x4xf32, #tpu.memory_space<vmem>>, vector<32x4xf32>
    %c0_3 = arith.constant 0 : index
    %c0_4 = arith.constant 0 : index
    %2 = vector.load %arg3[%c0_3, %c0_4] : memref<32x1xf32, #tpu.memory_space<vmem>>, vector<32x1xf32>
    %cst = arith.constant dense<0.000000e+00> : vector<32x8xf32>
    %3 = tpu.matmul %1, %0, %cst {dimension_numbers = #tpu.dot_dimension_numbers<[1], [0], [0], [1], [0, 0, 1, 1], [], []>} : vector<32x4xf32>, vector<4x8xf32>, vector<32x8xf32> -> vector<32x8xf32>
    %4 = vector.broadcast %2 : vector<32x1xf32> to vector<32x8xf32>
    %5 = arith.addf %3, %4 : vector<32x8xf32>
    %cst_5 = arith.constant 0.000000e+00 : f32
    %6 = vector.broadcast %cst_5 : f32 to vector<32x8xf32>
    %7 = arith.maximumf %5, %6 : vector<32x8xf32>
    %c0_6 = arith.constant 0 : index
    %c0_7 = arith.constant 0 : index
    %8 = vector.load %arg4[%c0_6, %c0_7] : memref<32x32xf32, #tpu.memory_space<vmem>>, vector<32x32xf32>
    %c0_8 = arith.constant 0 : index
    %c0_9 = arith.constant 0 : index
    %9 = vector.load %arg5[%c0_8, %c0_9] : memref<32x1xf32, #tpu.memory_space<vmem>>, vector<32x1xf32>
    %cst_10 = arith.constant dense<0.000000e+00> : vector<32x8xf32>
    %10 = tpu.matmul %8, %7, %cst_10 {dimension_numbers = #tpu.dot_dimension_numbers<[1], [0], [0], [1], [0, 0, 1, 1], [], []>} : vector<32x32xf32>, vector<32x8xf32>, vector<32x8xf32> -> vector<32x8xf32>
    %11 = vector.broadcast %9 : vector<32x1xf32> to vector<32x8xf32>
    %12 = arith.addf %10, %11 : vector<32x8xf32>
    %cst_11 = arith.constant 0.000000e+00 : f32
    %13 = vector.broadcast %cst_11 : f32 to vector<32x8xf32>
    %14 = arith.maximumf %12, %13 : vector<32x8xf32>
    %c0_12 = arith.constant 0 : index
    %c0_13 = arith.constant 0 : index
    %15 = vector.load %arg6[%c0_12, %c0_13] : memref<2x32xf32, #tpu.memory_space<vmem>>, vector<2x32xf32>
    %c0_14 = arith.constant 0 : index
    %c0_15 = arith.constant 0 : index
    %16 = vector.load %arg7[%c0_14, %c0_15] : memref<2x1xf32, #tpu.memory_space<vmem>>, vector<2x1xf32>
    %cst_16 = arith.constant dense<0.000000e+00> : vector<2x8xf32>
    %17 = tpu.matmul %15, %14, %cst_16 {dimension_numbers = #tpu.dot_dimension_numbers<[1], [0], [0], [1], [0, 0, 1, 1], [], []>} : vector<2x32xf32>, vector<32x8xf32>, vector<2x8xf32> -> vector<2x8xf32>
    %18 = vector.broadcast %16 : vector<2x1xf32> to vector<2x8xf32>
    %19 = arith.addf %17, %18 : vector<2x8xf32>
    %cst_17 = arith.constant 0.000000e+00 : f32
    %20 = vector.broadcast %cst_17 : f32 to vector<2x8xf32>
    %21 = arith.maximumf %19, %20 : vector<2x8xf32>
    %22 = math.absf %19 : vector<2x8xf32>
    %cst_18 = arith.constant 0.000000e+00 : f32
    %23 = vector.broadcast %cst_18 : f32 to vector<2x8xf32>
    %24 = arith.subf %23, %22 : vector<2x8xf32>
    %25 = math.exp %24 : vector<2x8xf32>
    %26 = math.log1p %25 : vector<2x8xf32>
    %27 = arith.addf %21, %26 : vector<2x8xf32>
    %c0_19 = arith.constant 0 : index
    %c0_20 = arith.constant 0 : index
    %28 = vector.load %arg8[%c0_19, %c0_20] : memref<2x8xf32, #tpu.memory_space<vmem>>, vector<2x8xf32>
    tpu.vector_store %arg8[%c0_19, %c0_20], %27 {strides = array<i32>} : memref<2x8xf32, #tpu.memory_space<vmem>>, vector<2x8xf32>,
    return
  }
  func.func @transform_0(%arg0: i32) -> (i32, i32) {
    %c0_i32 = arith.constant 0 : i32
    %c0_i32_0 = arith.constant 0 : i32
    return %c0_i32, %arg0 : i32, i32
  }
  func.func @transform_1(%arg0: i32) -> (i32, i32) {
    %c0_i32 = arith.constant 0 : i32
    %c0_i32_0 = arith.constant 0 : i32
    %c0_i32_1 = arith.constant 0 : i32
    return %c0_i32, %c0_i32_0 : i32, i32
  }
  func.func @transform_2(%arg0: i32) -> (i32, i32) {
    %c0_i32 = arith.constant 0 : i32
    %c0_i32_0 = arith.constant 0 : i32
    %c0_i32_1 = arith.constant 0 : i32
    return %c0_i32, %c0_i32_0 : i32, i32
  }
  func.func @transform_3(%arg0: i32) -> (i32, i32) {
    %c0_i32 = arith.constant 0 : i32
    %c0_i32_0 = arith.constant 0 : i32
    %c0_i32_1 = arith.constant 0 : i32
    return %c0_i32, %c0_i32_0 : i32, i32
  }
  func.func @transform_4(%arg0: i32) -> (i32, i32) {
    %c0_i32 = arith.constant 0 : i32
    %c0_i32_0 = arith.constant 0 : i32
    %c0_i32_1 = arith.constant 0 : i32
    return %c0_i32, %c0_i32_0 : i32, i32
  }
  func.func @transform_5(%arg0: i32) -> (i32, i32) {
    %c0_i32 = arith.constant 0 : i32
    %c0_i32_0 = arith.constant 0 : i32
    %c0_i32_1 = arith.constant 0 : i32
    return %c0_i32, %c0_i32_0 : i32, i32
  }
  func.func @transform_6(%arg0: i32) -> (i32, i32) {
    %c0_i32 = arith.constant 0 : i32
    %c0_i32_0 = arith.constant 0 : i32
    %c0_i32_1 = arith.constant 0 : i32
    return %c0_i32, %c0_i32_0 : i32, i32
  }
  func.func @transform_7(%arg0: i32) -> (i32, i32) {
    %c0_i32 = arith.constant 0 : i32
    %c0_i32_0 = arith.constant 0 : i32
    return %c0_i32, %arg0 : i32, i32
  }
}

</mosaic_0001>

<llo_original>
// kernel: tpu_custom_call.1
$region0: #{tpu_custom_call.1}
  #allocation0 [shape = 'u32[]', space=smem, size = 0x4, offset = 0x4, fixed_abs, tag = 'smem constant byte address 0x4 - core index']
  #allocation1 [shape = 'u32[144,128]{1,0:T(1,128)}', space=vmem, size = 0x12000, scoped, tag = 'internal scratch']
  %s0 = inlined_call_operand.vmem [shape: f32[4,8], index: 0, kind: input, shape index: {}]
  %s1 = inlined_call_operand.vmem [shape: f32[32,4], index: 1, kind: input, shape index: {}]
  %s2 = inlined_call_operand.vmem [shape: f32[32,1], index: 2, kind: input, shape index: {}]
  %s3 = inlined_call_operand.vmem [shape: f32[32,32], index: 3, kind: input, shape index: {}]
  %s4 = inlined_call_operand.vmem [shape: f32[32,1], index: 4, kind: input, shape index: {}]
  %s5 = inlined_call_operand.vmem [shape: f32[2,32], index: 5, kind: input, shape index: {}]
  %s6 = inlined_call_operand.vmem [shape: f32[2,1], index: 6, kind: input, shape index: {}]
  %s7 = inlined_call_operand.hbm [shape: f32[2,8], index: 7, kind: output, shape index: {}]
  %s8 = sld [smem:[#allocation0]]
  $region38: #{tpu_custom_call.1} parent=0
    _
  %s10 = ssub.s32 1, %s8
  %s11 = scalar_select 0, %s10, %s8
  $region1: #{tpu_custom_call.1} parent=0
    #allocation2 [shape = 'u8[1024]{0}', space=vmem, size = 0x400, scoped, tag = 'output window, operand 0, single buffered']
    #allocation3 [shape = 's32[1]{0}', space=sflag, size = 0x4, scoped, tag = 'scoped memory for tpu_custom_call.1']
    %12 = vsyncpa [#allocation3], 0
    // Predicated region
    $region2: #{tpu_custom_call.1} parent=1 // pred_check
      _
    $region3: #{tpu_custom_call.1} parent=1 // pred_check_branch
      %14 = sbr.rel (0) target = $region5
    $region4: #{tpu_custom_call.1} parent=1 // pred_region
      _
    $region5: #{tpu_custom_call.1} parent=1 // pred_fallthru
      _
    // Predicated region
    $region6: #{tpu_custom_call.1} parent=1 // pred_check
      _
    $region7: #{tpu_custom_call.1} parent=1 // pred_check_branch
      %16 = sbr.rel (0) target = $region9
    $region8: #{tpu_custom_call.1} parent=1 // pred_region
      _
    $region9: #{tpu_custom_call.1} parent=1 // pred_fallthru
      _
    // Predicated region
    $region10: #{tpu_custom_call.1} parent=1 // pred_check
      _
    $region11: #{tpu_custom_call.1} parent=1 // pred_check_branch
      %18 = sbr.rel (0) target = $region13
    $region12: #{tpu_custom_call.1} parent=1 // pred_region
      _
    $region13: #{tpu_custom_call.1} parent=1 // pred_fallthru
      _
    // Predicated region
    $region14: #{tpu_custom_call.1} parent=1 // pred_check
      _
    $region15: #{tpu_custom_call.1} parent=1 // pred_check_branch
      %20 = sbr.rel (0) target = $region17
    $region16: #{tpu_custom_call.1} parent=1 // pred_region
      _
    $region17: #{tpu_custom_call.1} parent=1 // pred_fallthru
      _
    // Predicated region
    $region18: #{tpu_custom_call.1} parent=1 // pred_check
      _
    $region19: #{tpu_custom_call.1} parent=1 // pred_check_branch
      %22 = sbr.rel (0) target = $region21
    $region20: #{tpu_custom_call.1} parent=1 // pred_region
      _
    $region21: #{tpu_custom_call.1} parent=1 // pred_fallthru
      _
    // Predicated region
    $region22: #{tpu_custom_call.1} parent=1 // pred_check
      _
    $region23: #{tpu_custom_call.1} parent=1 // pred_check_branch
      %24 = sbr.rel (0) target = $region25
    $region24: #{tpu_custom_call.1} parent=1 // pred_region
      _
    $region25: #{tpu_custom_call.1} parent=1 // pred_fallthru
      _
    // Predicated region
    $region26: #{tpu_custom_call.1} parent=1 // pred_check
      _
    $region27: #{tpu_custom_call.1} parent=1 // pred_check_branch
      %26 = sbr.rel (0) target = $region29
    $region28: #{tpu_custom_call.1} parent=1 // pred_region
      _
    $region29: #{tpu_custom_call.1} parent=1 // pred_fallthru
      _
    %v27 = vld [vmem:[%s0] sm:$0xf]
    %v28 = vld [vmem:[%s1] sm:$0xff]
    %v29 = vld [vmem:[%s1 + $0x8] sm:$0xff]
    %v30 = vld [vmem:[%s1 + $0x10] sm:$0xff]
    %v31 = vld [vmem:[%s1 + $0x18] sm:$0xff]
    %v32 = vld [vmem:[%s2] sm:$0xff]
    %v33 = vld [vmem:[%s2 + $0x8] sm:$0xff]
    %v34 = vld [vmem:[%s2 + $0x10] sm:$0xff]
    %v35 = vld [vmem:[%s2 + $0x18] sm:$0xff]
    %37 = vset.pattern.permute.xlu0 0
    %38 = vperm.xlu0 %37, %v32
    %v39 = vpop.permute.xlu0 %38
    %42 = vset.pattern.permute.xlu0 0
    %43 = vperm.xlu0 %42, %v33
    %v44 = vpop.permute.xlu0 %43
    %47 = vset.pattern.permute.xlu0 0
    %48 = vperm.xlu0 %47, %v34
    %v49 = vpop.permute.xlu0 %48
    %52 = vset.pattern.permute.xlu0 0
    %53 = vperm.xlu0 %52, %v35
    %v54 = vpop.permute.xlu0 %53
    %vm56 = vcmask 31744
    %v58 = vsel %vm56, %v28, 0
    %v61 = vsel %vm56, %v29, 0
    %v64 = vsel %vm56, %v30, 0
    %v67 = vsel %vm56, %v31, 0
    %vm69 = vcmask 1043456
    %v71 = vsel %vm69, %v27, 0
    %73 = vmatprep.subr.mxu0 0.0
    %74 = vmatpush1.msra.mxu0 %v71
    %75 = vmatprep.subr.mxu0 0.0
    %76 = vmatpush1.msra.mxu0 0.0
    %77 = vmatprep.subr.mxu0 0.0
    %78 = vmatpush1.msra.mxu0 0.0
    %79 = vmatprep.subr.mxu0 0.0
    %80 = vmatpush1.msra.mxu0 0.0
    %81 = vmatprep.subr.mxu0 0.0
    %82 = vmatpush1.msra.mxu0 0.0
    %83 = vmatprep.subr.mxu0 0.0
    %84 = vmatpush1.msra.mxu0 0.0
    %85 = vmatprep.subr.mxu0 0.0
    %86 = vmatpush1.msra.mxu0 0.0
    %87 = vmatprep.subr.mxu0 0.0
    %88 = vmatpush1.msra.mxu0 0.0
    %89 = vmatprep.subr.mxu0 0.0
    %90 = vmatpush1.msra.mxu0 0.0
    %91 = vmatprep.subr.mxu0 0.0
    %92 = vmatpush1.msra.mxu0 0.0
    %93 = vmatprep.subr.mxu0 0.0
    %94 = vmatpush1.msra.mxu0 0.0
    %95 = vmatprep.subr.mxu0 0.0
    %96 = vmatpush1.msra.mxu0 0.0
    %97 = vmatprep.subr.mxu0 0.0
    %98 = vmatpush1.msra.mxu0 0.0
    %99 = vmatprep.subr.mxu0 0.0
    %100 = vmatpush1.msra.mxu0 0.0
    %101 = vmatprep.subr.mxu0 0.0
    %102 = vmatpush1.msra.mxu0 0.0
    %103 = vmatprep.subr.mxu0 0.0
    %104 = vmatpush1.msra.mxu0 0.0
    %105 = vmatprep.subr.mxu0 0.0
    %106 = vmatpush1.msra.mxu0 0.0
    %107 = vmatprep.subr.mxu0 0.0
    %108 = vmatpush1.msra.mxu0 0.0
    %109 = vmatprep.subr.mxu0 0.0
    %110 = vmatpush1.msra.mxu0 0.0
    %111 = vmatprep.subr.mxu0 0.0
    %112 = vmatpush1.msra.mxu0 0.0
    %113 = vmatprep.subr.mxu0 0.0
    %114 = vmatpush1.msra.mxu0 0.0
    %115 = vmatprep.subr.mxu0 0.0
    %116 = vmatpush1.msra.mxu0 0.0
    %117 = vmatprep.subr.mxu0 0.0
    %118 = vmatpush1.msra.mxu0 0.0
    %119 = vmatprep.subr.mxu0 0.0
    %120 = vmatpush1.msra.mxu0 0.0
    %121 = vmatprep.subr.mxu0 0.0
    %122 = vmatpush1.msra.mxu0 0.0
    %123 = vmatprep.subr.mxu0 0.0
    %124 = vmatpush1.msra.mxu0 0.0
    %125 = vmatprep.subr.mxu0 0.0
    %126 = vmatpush1.msra.mxu0 0.0
    %127 = vmatprep.subr.mxu0 0.0
    %128 = vmatpush1.msra.mxu0 0.0
    %129 = vmatprep.subr.mxu0 0.0
    %130 = vmatpush1.msra.mxu0 0.0
    %131 = vmatprep.subr.mxu0 0.0
    %132 = vmatpush1.msra.mxu0 0.0
    %133 = vmatprep.subr.mxu0 0.0
    %134 = vmatpush1.msra.mxu0 0.0
    %135 = vmatprep.subr.mxu0 0.0
    %136 = vmatpush1.msra.mxu0 0.0
    %137 = vmatprep.mubr.f32.mxu0 0.0
    %138 = vmatmul.mubr.f32.gmra.mrb[0].mxu0 %v58
    %v139 = vpop.f32.mrb[0].mxu0
    %v140 = vadd.f32 %v39, %v139
    %v141 = vpop.f32.mrb[0].mxu0
    %142 = vmatprep.mubr.f32.mxu0 0.0
    %143 = vmatmul.mubr.f32.gmra.mrb[0].mxu0 %v61
    %v144 = vpop.f32.mrb[0].mxu0
    %v145 = vadd.f32 %v44, %v144
    %v146 = vpop.f32.mrb[0].mxu0
    %147 = vmatprep.mubr.f32.mxu0 0.0
    %148 = vmatmul.mubr.f32.gmra.mrb[0].mxu0 %v64
    %v149 = vpop.f32.mrb[0].mxu0
    %v150 = vadd.f32 %v49, %v149
    %v151 = vpop.f32.mrb[0].mxu0
    %152 = vmatprep.mubr.f32.mxu0 0.0
    %153 = vmatmul.mubr.f32.gmra.mrb[0].mxu0 %v67
    %v154 = vpop.f32.mrb[0].mxu0
    %v155 = vadd.f32 %v54, %v154
    %v156 = vpop.f32.mrb[0].mxu0
    %157 = vdwg.mxu0
    %v158 = vmax.f32 %v140, 0.0
    %v159 = vmax.f32 %v145, 0.0
    %v160 = vmax.f32 %v150, 0.0
    %v161 = vmax.f32 %v155, 0.0
    %v162 = vld [vmem:[%s3] sm:$0xff]
    %v163 = vld [vmem:[%s3 + $0x8] sm:$0xff]
    %v164 = vld [vmem:[%s3 + $0x10] sm:$0xff]
    %v165 = vld [vmem:[%s3 + $0x18] sm:$0xff]
    %v166 = vld [vmem:[%s4] sm:$0xff]
    %v167 = vld [vmem:[%s4 + $0x8] sm:$0xff]
    %v168 = vld [vmem:[%s4 + $0x10] sm:$0xff]
    %v169 = vld [vmem:[%s4 + $0x18] sm:$0xff]
    %171 = vset.pattern.permute.xlu0 0
    %172 = vperm.xlu0 %171, %v166
    %v173 = vpop.permute.xlu0 %172
    %176 = vset.pattern.permute.xlu0 0
    %177 = vperm.xlu0 %176, %v167
    %v178 = vpop.permute.xlu0 %177
    %181 = vset.pattern.permute.xlu0 0
    %182 = vperm.xlu0 %181, %v168
    %v183 = vpop.permute.xlu0 %182
    %186 = vset.pattern.permute.xlu0 0
    %187 = vperm.xlu0 %186, %v169
    %v188 = vpop.permute.xlu0 %187
    %vm190 = vcmask 261120
    %v192 = vsel %vm190, %v162, 0
    %v195 = vsel %vm190, %v163, 0
    %v198 = vsel %vm190, %v164, 0
    %v201 = vsel %vm190, %v165, 0
    %203 = vmatprep.subr.mxu0 0.0
    %204 = vmatpush1.msra.mxu0 %v158
    %205 = vmatprep.subr.mxu0 0.0
    %206 = vmatpush1.msra.mxu0 %v159
    %207 = vmatprep.subr.mxu0 0.0
    %208 = vmatpush1.msra.mxu0 %v160
    %209 = vmatprep.subr.mxu0 0.0
    %210 = vmatpush1.msra.mxu0 %v161
    %211 = vmatprep.subr.mxu0 0.0
    %212 = vmatpush1.msra.mxu0 0.0
    %213 = vmatprep.subr.mxu0 0.0
    %214 = vmatpush1.msra.mxu0 0.0
    %215 = vmatprep.subr.mxu0 0.0
    %216 = vmatpush1.msra.mxu0 0.0
    %217 = vmatprep.subr.mxu0 0.0
    %218 = vmatpush1.msra.mxu0 0.0
    %219 = vmatprep.subr.mxu0 0.0
    %220 = vmatpush1.msra.mxu0 0.0
    %221 = vmatprep.subr.mxu0 0.0
    %222 = vmatpush1.msra.mxu0 0.0
    %223 = vmatprep.subr.mxu0 0.0
    %224 = vmatpush1.msra.mxu0 0.0
    %225 = vmatprep.subr.mxu0 0.0
    %226 = vmatpush1.msra.mxu0 0.0
    %227 = vmatprep.subr.mxu0 0.0
    %228 = vmatpush1.msra.mxu0 0.0
    %229 = vmatprep.subr.mxu0 0.0
    %230 = vmatpush1.msra.mxu0 0.0
    %231 = vmatprep.subr.mxu0 0.0
    %232 = vmatpush1.msra.mxu0 0.0
    %233 = vmatprep.subr.mxu0 0.0
    %234 = vmatpush1.msra.mxu0 0.0
    %235 = vmatprep.subr.mxu0 0.0
    %236 = vmatpush1.msra.mxu0 0.0
    %237 = vmatprep.subr.mxu0 0.0
    %238 = vmatpush1.msra.mxu0 0.0
    %239 = vmatprep.subr.mxu0 0.0
    %240 = vmatpush1.msra.mxu0 0.0
    %241 = vmatprep.subr.mxu0 0.0
    %242 = vmatpush1.msra.mxu0 0.0
    %243 = vmatprep.subr.mxu0 0.0
    %244 = vmatpush1.msra.mxu0 0.0
    %245 = vmatprep.subr.mxu0 0.0
    %246 = vmatpush1.msra.mxu0 0.0
    %247 = vmatprep.subr.mxu0 0.0
    %248 = vmatpush1.msra.mxu0 0.0
    %249 = vmatprep.subr.mxu0 0.0
    %250 = vmatpush1.msra.mxu0 0.0
    %251 = vmatprep.subr.mxu0 0.0
    %252 = vmatpush1.msra.mxu0 0.0
    %253 = vmatprep.subr.mxu0 0.0
    %254 = vmatpush1.msra.mxu0 0.0
    %255 = vmatprep.subr.mxu0 0.0
    %256 = vmatpush1.msra.mxu0 0.0
    %257 = vmatprep.subr.mxu0 0.0
    %258 = vmatpush1.msra.mxu0 0.0
    %259 = vmatprep.subr.mxu0 0.0
    %260 = vmatpush1.msra.mxu0 0.0
    %261 = vmatprep.subr.mxu0 0.0
    %262 = vmatpush1.msra.mxu0 0.0
    %263 = vmatprep.subr.mxu0 0.0
    %264 = vmatpush1.msra.mxu0 0.0
    %265 = vmatprep.subr.mxu0 0.0
    %266 = vmatpush1.msra.mxu0 0.0
    %267 = vmatprep.mubr.f32.mxu0 0.0
    %268 = vmatmul.mubr.f32.gmra.mrb[0].mxu0 %v192
    %v269 = vpop.f32.mrb[0].mxu0
    %v270 = vadd.f32 %v173, %v269
    %v271 = vpop.f32.mrb[0].mxu0
    %272 = vmatprep.mubr.f32.mxu0 0.0
    %273 = vmatmul.mubr.f32.gmra.mrb[0].mxu0 %v195
    %v274 = vpop.f32.mrb[0].mxu0
    %v275 = vadd.f32 %v178, %v274
    %v276 = vpop.f32.mrb[0].mxu0
    %277 = vmatprep.mubr.f32.mxu0 0.0
    %278 = vmatmul.mubr.f32.gmra.mrb[0].mxu0 %v198
    %v279 = vpop.f32.mrb[0].mxu0
    %v280 = vadd.f32 %v183, %v279
    %v281 = vpop.f32.mrb[0].mxu0
    %282 = vmatprep.mubr.f32.mxu0 0.0
    %283 = vmatmul.mubr.f32.gmra.mrb[0].mxu0 %v201
    %v284 = vpop.f32.mrb[0].mxu0
    %v285 = vadd.f32 %v188, %v284
    %v286 = vpop.f32.mrb[0].mxu0
    %287 = vdwg.mxu0
    %v288 = vmax.f32 %v270, 0.0
    %v289 = vmax.f32 %v275, 0.0
    %v290 = vmax.f32 %v280, 0.0
    %v291 = vmax.f32 %v285, 0.0
    %v292 = vld [vmem:[%s5] sm:$0x3]
    %v293 = vld [vmem:[%s6] sm:$0x3]
    %295 = vset.pattern.permute.xlu0 0
    %296 = vperm.xlu0 %295, %v293
    %v297 = vpop.permute.xlu0 %296
    %v300 = vsel %vm190, %v292, 0
    %302 = vmatprep.subr.mxu0 0.0
    %303 = vmatpush1.msra.mxu0 %v288
    %304 = vmatprep.subr.mxu0 0.0
    %305 = vmatpush1.msra.mxu0 %v289
    %306 = vmatprep.subr.mxu0 0.0
    %307 = vmatpush1.msra.mxu0 %v290
    %308 = vmatprep.subr.mxu0 0.0
    %309 = vmatpush1.msra.mxu0 %v291
    %310 = vmatprep.subr.mxu0 0.0
    %311 = vmatpush1.msra.mxu0 0.0
    %312 = vmatprep.subr.mxu0 0.0
    %313 = vmatpush1.msra.mxu0 0.0
    %314 = vmatprep.subr.mxu0 0.0
    %315 = vmatpush1.msra.mxu0 0.0
    %316 = vmatprep.subr.mxu0 0.0
    %317 = vmatpush1.msra.mxu0 0.0
    %318 = vmatprep.subr.mxu0 0.0
    %319 = vmatpush1.msra.mxu0 0.0
    %320 = vmatprep.subr.mxu0 0.0
    %321 = vmatpush1.msra.mxu0 0.0
    %322 = vmatprep.subr.mxu0 0.0
    %323 = vmatpush1.msra.mxu0 0.0
    %324 = vmatprep.subr.mxu0 0.0
    %325 = vmatpush1.msra.mxu0 0.0
    %326 = vmatprep.subr.mxu0 0.0
    %327 = vmatpush1.msra.mxu0 0.0
    %328 = vmatprep.subr.mxu0 0.0
    %329 = vmatpush1.msra.mxu0 0.0
    %330 = vmatprep.subr.mxu0 0.0
    %331 = vmatpush1.msra.mxu0 0.0
    %332 = vmatprep.subr.mxu0 0.0
    %333 = vmatpush1.msra.mxu0 0.0
    %334 = vmatprep.subr.mxu0 0.0
    %335 = vmatpush1.msra.mxu0 0.0
    %336 = vmatprep.subr.mxu0 0.0
    %337 = vmatpush1.msra.mxu0 0.0
    %338 = vmatprep.subr.mxu0 0.0
    %339 = vmatpush1.msra.mxu0 0.0
    %340 = vmatprep.subr.mxu0 0.0
    %341 = vmatpush1.msra.mxu0 0.0
    %342 = vmatprep.subr.mxu0 0.0
    %343 = vmatpush1.msra.mxu0 0.0
    %344 = vmatprep.subr.mxu0 0.0
    %345 = vmatpush1.msra.mxu0 0.0
    %346 = vmatprep.subr.mxu0 0.0
    %347 = vmatpush1.msra.mxu0 0.0
    %348 = vmatprep.subr.mxu0 0.0
    %349 = vmatpush1.msra.mxu0 0.0
    %350 = vmatprep.subr.mxu0 0.0
    %351 = vmatpush1.msra.mxu0 0.0
    %352 = vmatprep.subr.mxu0 0.0
    %353 = vmatpush1.msra.mxu0 0.0
    %354 = vmatprep.subr.mxu0 0.0
    %355 = vmatpush1.msra.mxu0 0.0
    %356 = vmatprep.subr.mxu0 0.0
    %357 = vmatpush1.msra.mxu0 0.0
    %358 = vmatprep.subr.mxu0 0.0
    %359 = vmatpush1.msra.mxu0 0.0
    %360 = vmatprep.subr.mxu0 0.0
    %361 = vmatpush1.msra.mxu0 0.0
    %362 = vmatprep.subr.mxu0 0.0
    %363 = vmatpush1.msra.mxu0 0.0
    %364 = vmatprep.subr.mxu0 0.0
    %365 = vmatpush1.msra.mxu0 0.0
    %366 = vmatprep.mubr.f32.mxu0 0.0
    %367 = vmatmul.mubr.f32.gmra.mrb[0].mxu0 %v300
    %v368 = vpop.f32.mrb[0].mxu0
    %v369 = vadd.f32 %v297, %v368
    %v370 = vpop.f32.mrb[0].mxu0
    %371 = vdwg.mxu0
    %v372 = vmax.f32 %v369, 0.0
    %v373 = vand.u32 2147483647, %v369
    %v374 = vsub.f32 0.0, %v373
    %v375 = vmul.f32 %v374, 1.442695
    %v376 = vpow.pop %v375
    %v377 = vadd.f32 %v376, 1.0
    %v378 = vlog2.pop %v377
    %v379 = vmul.f32 %v378, 0.6931472
    %v380 = vmul.f32 -0.5, %v376
    %v381 = vadd.f32 %v380, 1.0
    %v382 = vmul.f32 %v381, %v376
    %v383 = vand.u32 2147483647, %v376
    %vm384 = vcmp.lt.f32.partialorder %v383, 0.0004427343
    %v385 = vsel %vm384, %v382, %v379
    %v386 = vadd.f32 %v372, %v385
    %vm387 = vcmask 58368
    %388 = vst.msk [vmem:[#allocation2] sm:$0x3] %vm387, %v386
    // Predicated region
    $region30: #{tpu_custom_call.1} parent=1 // pred_check
      _
    $region31: #{tpu_custom_call.1} parent=1 // pred_check_branch
      %390 = sbr.rel (0) target = $region33
    $region32: #{tpu_custom_call.1} parent=1 // pred_region
      %s392 = ssub.s32 32, 32
      %393 = vsyncadd [#allocation3], %s392
      %s395 = sshll.u32 [#allocation2], 4
      %s396 = int_to_ptr.vmem [resolvable:$true] %s395
      %398 = dma.vmem_to_hbm [thread:$0]  %s396, 32, %s7, [#allocation3]
    $region33: #{tpu_custom_call.1} parent=1 // pred_fallthru
      _
    // Predicated region
    $region34: #{tpu_custom_call.1} parent=1 // pred_check
      _
    $region35: #{tpu_custom_call.1} parent=1 // pred_check_branch
      %400 = sbr.rel (0) target = $region37
    $region36: #{tpu_custom_call.1} parent=1 // pred_region
      %401 = dma.done [#allocation3], 32
    $region37: #{tpu_custom_call.1} parent=1 // pred_fallthru
      _
    %402 = vsyncpa [#allocation3], 1

// kernel: tpu_custom_call.1
$region0: #{tpu_custom_call.1}
  #allocation0 [shape = 'u32[]', space=smem, size = 0x4, offset = 0x4, fixed_abs, tag = 'smem constant byte address 0x4 - core index']
  #allocation1 [shape = 'u32[144,128]{1,0:T(1,128)}', space=vmem, size = 0x12000, scoped, tag = 'internal scratch']
  %s0 = inlined_call_operand.vmem [shape: f32[4,8], index: 0, kind: input, shape index: {}]
  %s1 = inlined_call_operand.vmem [shape: f32[32,4], index: 1, kind: input, shape index: {}]
  %s2 = inlined_call_operand.vmem [shape: f32[32,1], index: 2, kind: input, shape index: {}]
  %s3 = inlined_call_operand.vmem [shape: f32[32,32], index: 3, kind: input, shape index: {}]
  %s4 = inlined_call_operand.vmem [shape: f32[32,1], index: 4, kind: input, shape index: {}]
  %s5 = inlined_call_operand.vmem [shape: f32[2,32], index: 5, kind: input, shape index: {}]
  %s6 = inlined_call_operand.vmem [shape: f32[2,1], index: 6, kind: input, shape index: {}]
  %s7 = inlined_call_operand.hbm [shape: f32[2,8], index: 7, kind: output, shape index: {}]
  %s8 = sld [smem:[#allocation0]]
  $region38: #{tpu_custom_call.1} parent=0
    _
  %s10 = ssub.s32 1, %s8
  %s11 = scalar_select 0, %s10, %s8
  $region1: #{tpu_custom_call.1} parent=0
    #allocation2 [shape = 'u8[1024]{0}', space=vmem, size = 0x400, scoped, tag = 'output window, operand 0, single buffered']
    #allocation3 [shape = 's32[1]{0}', space=sflag, size = 0x4, scoped, tag = 'scoped memory for tpu_custom_call.1']
    %12 = vsyncpa [#allocation3], 0
    // Predicated region
    $region2: #{tpu_custom_call.1} parent=1 // pred_check
      _
    $region3: #{tpu_custom_call.1} parent=1 // pred_check_branch
      %14 = sbr.rel (0) target = $region5
    $region4: #{tpu_custom_call.1} parent=1 // pred_region
      _
    $region5: #{tpu_custom_call.1} parent=1 // pred_fallthru
      _
    // Predicated region
    $region6: #{tpu_custom_call.1} parent=1 // pred_check
      _
    $region7: #{tpu_custom_call.1} parent=1 // pred_check_branch
      %16 = sbr.rel (0) target = $region9
    $region8: #{tpu_custom_call.1} parent=1 // pred_region
      _
    $region9: #{tpu_custom_call.1} parent=1 // pred_fallthru
      _
    // Predicated region
    $region10: #{tpu_custom_call.1} parent=1 // pred_check
      _
    $region11: #{tpu_custom_call.1} parent=1 // pred_check_branch
      %18 = sbr.rel (0) target = $region13
    $region12: #{tpu_custom_call.1} parent=1 // pred_region
      _
    $region13: #{tpu_custom_call.1} parent=1 // pred_fallthru
      _
    // Predicated region
    $region14: #{tpu_custom_call.1} parent=1 // pred_check
      _
    $region15: #{tpu_custom_call.1} parent=1 // pred_check_branch
      %20 = sbr.rel (0) target = $region17
    $region16: #{tpu_custom_call.1} parent=1 // pred_region
      _
    $region17: #{tpu_custom_call.1} parent=1 // pred_fallthru
      _
    // Predicated region
    $region18: #{tpu_custom_call.1} parent=1 // pred_check
      _
    $region19: #{tpu_custom_call.1} parent=1 // pred_check_branch
      %22 = sbr.rel (0) target = $region21
    $region20: #{tpu_custom_call.1} parent=1 // pred_region
      _
    $region21: #{tpu_custom_call.1} parent=1 // pred_fallthru
      _
    // Predicated region
    $region22: #{tpu_custom_call.1} parent=1 // pred_check
      _
    $region23: #{tpu_custom_call.1} parent=1 // pred_check_branch
      %24 = sbr.rel (0) target = $region25
    $region24: #{tpu_custom_call.1} parent=1 // pred_region
      _
    $region25: #{tpu_custom_call.1} parent=1 // pred_fallthru
      _
    // Predicated region
    $region26: #{tpu_custom_call.1} parent=1 // pred_check
      _
    $region27: #{tpu_custom_call.1} parent=1 // pred_check_branch
      %26 = sbr.rel (0) target = $region29
    $region28: #{tpu_custom_call.1} parent=1 // pred_region
      _
    $region29: #{tpu_custom_call.1} parent=1 // pred_fallthru
      _
    %v27 = vld [vmem:[%s0] sm:$0xf]
    %v28 = vld [vmem:[%s1] sm:$0xff]
    %v29 = vld [vmem:[%s1 + $0x8] sm:$0xff]
    %v30 = vld [vmem:[%s1 + $0x10] sm:$0xff]
    %v31 = vld [vmem:[%s1 + $0x18] sm:$0xff]
    %v32 = vld [vmem:[%s2] sm:$0xff]
    %v33 = vld [vmem:[%s2 + $0x8] sm:$0xff]
    %v34 = vld [vmem:[%s2 + $0x10] sm:$0xff]
    %v35 = vld [vmem:[%s2 + $0x18] sm:$0xff]
    %37 = vset.pattern.permute.xlu0 0
    %38 = vperm.xlu0 %37, %v32
    %v39 = vpop.permute.xlu0 %38
    %42 = vset.pattern.permute.xlu0 0
    %43 = vperm.xlu0 %42, %v33
    %v44 = vpop.permute.xlu0 %43
    %47 = vset.pattern.permute.xlu0 0
    %48 = vperm.xlu0 %47, %v34
    %v49 = vpop.permute.xlu0 %48
    %52 = vset.pattern.permute.xlu0 0
    %53 = vperm.xlu0 %52, %v35
    %v54 = vpop.permute.xlu0 %53
    %vm56 = vcmask 31744
    %v58 = vsel %vm56, %v28, 0
    %v61 = vsel %vm56, %v29, 0
    %v64 = vsel %vm56, %v30, 0
    %v67 = vsel %vm56, %v31, 0
    %vm69 = vcmask 1043456
    %v71 = vsel %vm69, %v27, 0
    %73 = vmatprep.subr.mxu0 0.0
    %74 = vmatpush1.msra.mxu0 %v71
    %75 = vmatprep.subr.mxu0 0.0
    %76 = vmatpush1.msra.mxu0 0.0
    %77 = vmatprep.subr.mxu0 0.0
    %78 = vmatpush1.msra.mxu0 0.0
    %79 = vmatprep.subr.mxu0 0.0
    %80 = vmatpush1.msra.mxu0 0.0
    %81 = vmatprep.subr.mxu0 0.0
    %82 = vmatpush1.msra.mxu0 0.0
    %83 = vmatprep.subr.mxu0 0.0
    %84 = vmatpush1.msra.mxu0 0.0
    %85 = vmatprep.subr.mxu0 0.0
    %86 = vmatpush1.msra.mxu0 0.0
    %87 = vmatprep.subr.mxu0 0.0
    %88 = vmatpush1.msra.mxu0 0.0
    %89 = vmatprep.subr.mxu0 0.0
    %90 = vmatpush1.msra.mxu0 0.0
    %91 = vmatprep.subr.mxu0 0.0
    %92 = vmatpush1.msra.mxu0 0.0
    %93 = vmatprep.subr.mxu0 0.0
    %94 = vmatpush1.msra.mxu0 0.0
    %95 = vmatprep.subr.mxu0 0.0
    %96 = vmatpush1.msra.mxu0 0.0
    %97 = vmatprep.subr.mxu0 0.0
    %98 = vmatpush1.msra.mxu0 0.0
    %99 = vmatprep.subr.mxu0 0.0
    %100 = vmatpush1.msra.mxu0 0.0
    %101 = vmatprep.subr.mxu0 0.0
    %102 = vmatpush1.msra.mxu0 0.0
    %103 = vmatprep.subr.mxu0 0.0
    %104 = vmatpush1.msra.mxu0 0.0
    %105 = vmatprep.subr.mxu0 0.0
    %106 = vmatpush1.msra.mxu0 0.0
    %107 = vmatprep.subr.mxu0 0.0
    %108 = vmatpush1.msra.mxu0 0.0
    %109 = vmatprep.subr.mxu0 0.0
    %110 = vmatpush1.msra.mxu0 0.0
    %111 = vmatprep.subr.mxu0 0.0
    %112 = vmatpush1.msra.mxu0 0.0
    %113 = vmatprep.subr.mxu0 0.0
    %114 = vmatpush1.msra.mxu0 0.0
    %115 = vmatprep.subr.mxu0 0.0
    %116 = vmatpush1.msra.mxu0 0.0
    %117 = vmatprep.subr.mxu0 0.0
    %118 = vmatpush1.msra.mxu0 0.0
    %119 = vmatprep.subr.mxu0 0.0
    %120 = vmatpush1.msra.mxu0 0.0
    %121 = vmatprep.subr.mxu0 0.0
    %122 = vmatpush1.msra.mxu0 0.0
    %123 = vmatprep.subr.mxu0 0.0
    %124 = vmatpush1.msra.mxu0 0.0
    %125 = vmatprep.subr.mxu0 0.0
    %126 = vmatpush1.msra.mxu0 0.0
    %127 = vmatprep.subr.mxu0 0.0
    %128 = vmatpush1.msra.mxu0 0.0
    %129 = vmatprep.subr.mxu0 0.0
    %130 = vmatpush1.msra.mxu0 0.0
    %131 = vmatprep.subr.mxu0 0.0
    %132 = vmatpush1.msra.mxu0 0.0
    %133 = vmatprep.subr.mxu0 0.0
    %134 = vmatpush1.msra.mxu0 0.0
    %135 = vmatprep.subr.mxu0 0.0
    %136 = vmatpush1.msra.mxu0 0.0
    %137 = vmatprep.mubr.f32.mxu0 0.0
    %138 = vmatmul.mubr.f32.gmra.mrb[0].mxu0 %v58
    %v139 = vpop.f32.mrb[0].mxu0
    %v140 = vadd.f32 %v39, %v139
    %v141 = vpop.f32.mrb[0].mxu0
    %142 = vmatprep.mubr.f32.mxu0 0.0
    %143 = vmatmul.mubr.f32.gmra.mrb[0].mxu0 %v61
    %v144 = vpop.f32.mrb[0].mxu0
    %v145 = vadd.f32 %v44, %v144
    %v146 = vpop.f32.mrb[0].mxu0
    %147 = vmatprep.mubr.f32.mxu0 0.0
    %148 = vmatmul.mubr.f32.gmra.mrb[0].mxu0 %v64
    %v149 = vpop.f32.mrb[0].mxu0
    %v150 = vadd.f32 %v49, %v149
    %v151 = vpop.f32.mrb[0].mxu0
    %152 = vmatprep.mubr.f32.mxu0 0.0
    %153 = vmatmul.mubr.f32.gmra.mrb[0].mxu0 %v67
    %v154 = vpop.f32.mrb[0].mxu0
    %v155 = vadd.f32 %v54, %v154
    %v156 = vpop.f32.mrb[0].mxu0
    %157 = vdwg.mxu0
    %v158 = vmax.f32 %v140, 0.0
    %v159 = vmax.f32 %v145, 0.0
    %v160 = vmax.f32 %v150, 0.0
    %v161 = vmax.f32 %v155, 0.0
    %v162 = vld [vmem:[%s3] sm:$0xff]
    %v163 = vld [vmem:[%s3 + $0x8] sm:$0xff]
    %v164 = vld [vmem:[%s3 + $0x10] sm:$0xff]
    %v165 = vld [vmem:[%s3 + $0x18] sm:$0xff]
    %v166 = vld [vmem:[%s4] sm:$0xff]
    %v167 = vld [vmem:[%s4 + $0x8] sm:$0xff]
    %v168 = vld [vmem:[%s4 + $0x10] sm:$0xff]
    %v169 = vld [vmem:[%s4 + $0x18] sm:$0xff]
    %171 = vset.pattern.permute.xlu0 0
    %172 = vperm.xlu0 %171, %v166
    %v173 = vpop.permute.xlu0 %172
    %176 = vset.pattern.permute.xlu0 0
    %177 = vperm.xlu0 %176, %v167
    %v178 = vpop.permute.xlu0 %177
    %181 = vset.pattern.permute.xlu0 0
    %182 = vperm.xlu0 %181, %v168
    %v183 = vpop.permute.xlu0 %182
    %186 = vset.pattern.permute.xlu0 0
    %187 = vperm.xlu0 %186, %v169
    %v188 = vpop.permute.xlu0 %187
    %vm190 = vcmask 261120
    %v192 = vsel %vm190, %v162, 0
    %v195 = vsel %vm190, %v163, 0
    %v198 = vsel %vm190, %v164, 0
    %v201 = vsel %vm190, %v165, 0
    %203 = vmatprep.subr.mxu0 0.0
    %204 = vmatpush1.msra.mxu0 %v158
    %205 = vmatprep.subr.mxu0 0.0
    %206 = vmatpush1.msra.mxu0 %v159
    %207 = vmatprep.subr.mxu0 0.0
    %208 = vmatpush1.msra.mxu0 %v160
    %209 = vmatprep.subr.mxu0 0.0
    %210 = vmatpush1.msra.mxu0 %v161
    %211 = vmatprep.subr.mxu0 0.0
    %212 = vmatpush1.msra.mxu0 0.0
    %213 = vmatprep.subr.mxu0 0.0
    %214 = vmatpush1.msra.mxu0 0.0
    %215 = vmatprep.subr.mxu0 0.0
    %216 = vmatpush1.msra.mxu0 0.0
    %217 = vmatprep.subr.mxu0 0.0
    %218 = vmatpush1.msra.mxu0 0.0
    %219 = vmatprep.subr.mxu0 0.0
    %220 = vmatpush1.msra.mxu0 0.0
    %221 = vmatprep.subr.mxu0 0.0
    %222 = vmatpush1.msra.mxu0 0.0
    %223 = vmatprep.subr.mxu0 0.0
    %224 = vmatpush1.msra.mxu0 0.0
    %225 = vmatprep.subr.mxu0 0.0
    %226 = vmatpush1.msra.mxu0 0.0
    %227 = vmatprep.subr.mxu0 0.0
    %228 = vmatpush1.msra.mxu0 0.0
    %229 = vmatprep.subr.mxu0 0.0
    %230 = vmatpush1.msra.mxu0 0.0
    %231 = vmatprep.subr.mxu0 0.0
    %232 = vmatpush1.msra.mxu0 0.0
    %233 = vmatprep.subr.mxu0 0.0
    %234 = vmatpush1.msra.mxu0 0.0
    %235 = vmatprep.subr.mxu0 0.0
    %236 = vmatpush1.msra.mxu0 0.0
    %237 = vmatprep.subr.mxu0 0.0
    %238 = vmatpush1.msra.mxu0 0.0
    %239 = vmatprep.subr.mxu0 0.0
    %240 = vmatpush1.msra.mxu0 0.0
    %241 = vmatprep.subr.mxu0 0.0
    %242 = vmatpush1.msra.mxu0 0.0
    %243 = vmatprep.subr.mxu0 0.0
    %244 = vmatpush1.msra.mxu0 0.0
    %245 = vmatprep.subr.mxu0 0.0
    %246 = vmatpush1.msra.mxu0 0.0
    %247 = vmatprep.subr.mxu0 0.0
    %248 = vmatpush1.msra.mxu0 0.0
    %249 = vmatprep.subr.mxu0 0.0
    %250 = vmatpush1.msra.mxu0 0.0
    %251 = vmatprep.subr.mxu0 0.0
    %252 = vmatpush1.msra.mxu0 0.0
    %253 = vmatprep.subr.mxu0 0.0
    %254 = vmatpush1.msra.mxu0 0.0
    %255 = vmatprep.subr.mxu0 0.0
    %256 = vmatpush1.msra.mxu0 0.0
    %257 = vmatprep.subr.mxu0 0.0
    %258 = vmatpush1.msra.mxu0 0.0
    %259 = vmatprep.subr.mxu0 0.0
    %260 = vmatpush1.msra.mxu0 0.0
    %261 = vmatprep.subr.mxu0 0.0
    %262 = vmatpush1.msra.mxu0 0.0
    %263 = vmatprep.subr.mxu0 0.0
    %264 = vmatpush1.msra.mxu0 0.0
    %265 = vmatprep.subr.mxu0 0.0
    %266 = vmatpush1.msra.mxu0 0.0
    %267 = vmatprep.mubr.f32.mxu0 0.0
    %268 = vmatmul.mubr.f32.gmra.mrb[0].mxu0 %v192
    %v269 = vpop.f32.mrb[0].mxu0
    %v270 = vadd.f32 %v173, %v269
    %v271 = vpop.f32.mrb[0].mxu0
    %272 = vmatprep.mubr.f32.mxu0 0.0
    %273 = vmatmul.mubr.f32.gmra.mrb[0].mxu0 %v195
    %v274 = vpop.f32.mrb[0].mxu0
    %v275 = vadd.f32 %v178, %v274
    %v276 = vpop.f32.mrb[0].mxu0
    %277 = vmatprep.mubr.f32.mxu0 0.0
    %278 = vmatmul.mubr.f32.gmra.mrb[0].mxu0 %v198
    %v279 = vpop.f32.mrb[0].mxu0
    %v280 = vadd.f32 %v183, %v279
    %v281 = vpop.f32.mrb[0].mxu0
    %282 = vmatprep.mubr.f32.mxu0 0.0
    %283 = vmatmul.mubr.f32.gmra.mrb[0].mxu0 %v201
    %v284 = vpop.f32.mrb[0].mxu0
    %v285 = vadd.f32 %v188, %v284
    %v286 = vpop.f32.mrb[0].mxu0
    %287 = vdwg.mxu0
    %v288 = vmax.f32 %v270, 0.0
    %v289 = vmax.f32 %v275, 0.0
    %v290 = vmax.f32 %v280, 0.0
    %v291 = vmax.f32 %v285, 0.0
    %v292 = vld [vmem:[%s5] sm:$0x3]
    %v293 = vld [vmem:[%s6] sm:$0x3]
    %295 = vset.pattern.permute.xlu0 0
    %296 = vperm.xlu0 %295, %v293
    %v297 = vpop.permute.xlu0 %296
    %v300 = vsel %vm190, %v292, 0
    %302 = vmatprep.subr.mxu0 0.0
    %303 = vmatpush1.msra.mxu0 %v288
    %304 = vmatprep.subr.mxu0 0.0
    %305 = vmatpush1.msra.mxu0 %v289
    %306 = vmatprep.subr.mxu0 0.0
    %307 = vmatpush1.msra.mxu0 %v290
    %308 = vmatprep.subr.mxu0 0.0
    %309 = vmatpush1.msra.mxu0 %v291
    %310 = vmatprep.subr.mxu0 0.0
    %311 = vmatpush1.msra.mxu0 0.0
    %312 = vmatprep.subr.mxu0 0.0
    %313 = vmatpush1.msra.mxu0 0.0
    %314 = vmatprep.subr.mxu0 0.0
    %315 = vmatpush1.msra.mxu0 0.0
    %316 = vmatprep.subr.mxu0 0.0
    %317 = vmatpush1.msra.mxu0 0.0
    %318 = vmatprep.subr.mxu0 0.0
    %319 = vmatpush1.msra.mxu0 0.0
    %320 = vmatprep.subr.mxu0 0.0
    %321 = vmatpush1.msra.mxu0 0.0
    %322 = vmatprep.subr.mxu0 0.0
    %323 = vmatpush1.msra.mxu0 0.0
    %324 = vmatprep.subr.mxu0 0.0
    %325 = vmatpush1.msra.mxu0 0.0
    %326 = vmatprep.subr.mxu0 0.0
    %327 = vmatpush1.msra.mxu0 0.0
    %328 = vmatprep.subr.mxu0 0.0
    %329 = vmatpush1.msra.mxu0 0.0
    %330 = vmatprep.subr.mxu0 0.0
    %331 = vmatpush1.msra.mxu0 0.0
    %332 = vmatprep.subr.mxu0 0.0
    %333 = vmatpush1.msra.mxu0 0.0
    %334 = vmatprep.subr.mxu0 0.0
    %335 = vmatpush1.msra.mxu0 0.0
    %336 = vmatprep.subr.mxu0 0.0
    %337 = vmatpush1.msra.mxu0 0.0
    %338 = vmatprep.subr.mxu0 0.0
    %339 = vmatpush1.msra.mxu0 0.0
    %340 = vmatprep.subr.mxu0 0.0
    %341 = vmatpush1.msra.mxu0 0.0
    %342 = vmatprep.subr.mxu0 0.0
    %343 = vmatpush1.msra.mxu0 0.0
    %344 = vmatprep.subr.mxu0 0.0
    %345 = vmatpush1.msra.mxu0 0.0
    %346 = vmatprep.subr.mxu0 0.0
    %347 = vmatpush1.msra.mxu0 0.0
    %348 = vmatprep.subr.mxu0 0.0
    %349 = vmatpush1.msra.mxu0 0.0
    %350 = vmatprep.subr.mxu0 0.0
    %351 = vmatpush1.msra.mxu0 0.0
    %352 = vmatprep.subr.mxu0 0.0
    %353 = vmatpush1.msra.mxu0 0.0
    %354 = vmatprep.subr.mxu0 0.0
    %355 = vmatpush1.msra.mxu0 0.0
    %356 = vmatprep.subr.mxu0 0.0
    %357 = vmatpush1.msra.mxu0 0.0
    %358 = vmatprep.subr.mxu0 0.0
    %359 = vmatpush1.msra.mxu0 0.0
    %360 = vmatprep.subr.mxu0 0.0
    %361 = vmatpush1.msra.mxu0 0.0
    %362 = vmatprep.subr.mxu0 0.0
    %363 = vmatpush1.msra.mxu0 0.0
    %364 = vmatprep.subr.mxu0 0.0
    %365 = vmatpush1.msra.mxu0 0.0
    %366 = vmatprep.mubr.f32.mxu0 0.0
    %367 = vmatmul.mubr.f32.gmra.mrb[0].mxu0 %v300
    %v368 = vpop.f32.mrb[0].mxu0
    %v369 = vadd.f32 %v297, %v368
    %v370 = vpop.f32.mrb[0].mxu0
    %371 = vdwg.mxu0
    %v372 = vmax.f32 %v369, 0.0
    %v373 = vand.u32 2147483647, %v369
    %v374 = vsub.f32 0.0, %v373
    %v375 = vmul.f32 %v374, 1.442695
    %v376 = vpow.pop %v375
    %v377 = vadd.f32 %v376, 1.0
    %v378 = vlog2.pop %v377
    %v379 = vmul.f32 %v378, 0.6931472
    %v380 = vmul.f32 -0.5, %v376
    %v381 = vadd.f32 %v380, 1.0
    %v382 = vmul.f32 %v381, %v376
    %v383 = vand.u32 2147483647, %v376
    %vm384 = vcmp.lt.f32.partialorder %v383, 0.0004427343
    %v385 = vsel %vm384, %v382, %v379
    %v386 = vadd.f32 %v372, %v385
    %vm387 = vcmask 58368
    %388 = vst.msk [vmem:[#allocation2] sm:$0x3] %vm387, %v386
    // Predicated region
    $region30: #{tpu_custom_call.1} parent=1 // pred_check
      _
    $region31: #{tpu_custom_call.1} parent=1 // pred_check_branch
      %390 = sbr.rel (0) target = $region33
    $region32: #{tpu_custom_call.1} parent=1 // pred_region
      %s392 = ssub.s32 32, 32
      %393 = vsyncadd [#allocation3], %s392
      %s395 = sshll.u32 [#allocation2], 4
      %s396 = int_to_ptr.vmem [resolvable:$true] %s395
      %398 = dma.vmem_to_hbm [thread:$0]  %s396, 32, %s7, [#allocation3]
    $region33: #{tpu_custom_call.1} parent=1 // pred_fallthru
      _
    // Predicated region
    $region34: #{tpu_custom_call.1} parent=1 // pred_check
      _
    $region35: #{tpu_custom_call.1} parent=1 // pred_check_branch
      %400 = sbr.rel (0) target = $region37
    $region36: #{tpu_custom_call.1} parent=1 // pred_region
      %401 = dma.done [#allocation3], 32
    $region37: #{tpu_custom_call.1} parent=1 // pred_fallthru
      _
    %402 = vsyncpa [#allocation3], 1

</llo_original>
